<compile_context>
chip_gen: v7x
topology: tpu7x:2x2x1
jax: 0.10.0
libtpu: 0.0.40
codegen_flags: <defaults>
</compile_context>

<pallas_src>
import functools
import math

import jax
import jax.numpy as jnp
from jax.experimental import pallas as pl
from jax.experimental.pallas import tpu as pltpu


def _round_up(n, m):
    return ((n + m - 1) // m) * m


def _vmem_cap_bytes():
    """Physical VMEM per core (128 MiB v5e/v6e, 64 MiB v7x); conservative fallback."""
    try:
        return int(pltpu.get_tpu_info().vmem_capacity_bytes)
    except Exception:  # pragma: no cover - interpret/CPU fallback
        return 64 << 20


def _mlp_fused_kernel(*refs, n_layers, n_subtiles):
    """refs = (x, w0, b0, w1, b1, ..., w{L-1}, b{L-1}, out).

    Computes h = relu(h @ W_l + b_l) for every layer (including the last,
    matching the reference module).  Weights arrive pre-cast (bf16 or f32);
    accumulation and the bias+ReLU epilogue are f32.  The batch tile is split
    into `n_subtiles` independent chains so the MXU is not idle during the
    VPU epilogue of the other chain.
    """
    x_ref = refs[0]
    out_ref = refs[-1]
    sub = x_ref.shape[0] // n_subtiles
    for s in range(n_subtiles):
        h = x_ref[s * sub:(s + 1) * sub, :].astype(jnp.float32)
        for l in range(n_layers):
            w_ref = refs[1 + 2 * l]
            b_ref = refs[2 + 2 * l]
            # MXU matmul: operands in the weight dtype (bf16 by default),
            # accumulate in f32.  Weights are NOT re-cast here (pre-cast once).
            y = jnp.dot(h.astype(w_ref.dtype), w_ref[...],
                        preferred_element_type=jnp.float32)
            y = y + b_ref[...].astype(jnp.float32)   # (1, out) broadcasts over rows
            h = jnp.maximum(y, 0.0)                  # ReLU after EVERY layer
        out_ref[s * sub:(s + 1) * sub, :] = h.astype(out_ref.dtype)


def _fused_layers_call(x_p, layer_params, tile_b, out_dtype):
    """One fused pallas_call over `layer_params` with VMEM-resident weights."""
    B_p, in_p = x_p.shape
    out_p = layer_params[-1][0].shape[1]
    n_layers = len(layer_params)
    n_subtiles = 2 if tile_b >= 16 else 1

    inputs = [x_p]
    in_specs = [pl.BlockSpec((tile_b, in_p), lambda i: (i, 0))]
    dims_p_all = [in_p]
    weight_bytes = 0
    for (w_p, b_p) in layer_params:
        # Constant index_map => the block never changes: single-buffer it.
        in_specs.append(pl.BlockSpec(w_p.shape, lambda i: (0, 0),
                                     pipeline_mode=pl.Buffered(1)))
        in_specs.append(pl.BlockSpec(b_p.shape, lambda i: (0, 0),
                                     pipeline_mode=pl.Buffered(1)))
        inputs += [w_p, b_p]
        dims_p_all.append(w_p.shape[1])
        weight_bytes += (w_p.size * w_p.dtype.itemsize
                         + b_p.size * b_p.dtype.itemsize)

    out_specs = pl.BlockSpec((tile_b, out_p), lambda i: (i, 0))
    out_shape = jax.ShapeDtypeStruct((B_p, out_p), out_dtype)

    # VMEM budget: single-buffered residents + double-buffered x/out tiles +
    # a few live f32 activation temporaries (h, y, cast copies) + headroom,
    # capped at 85% of the physical per-core VMEM (gen-aware).
    max_dim_p = max(dims_p_all)
    io_bytes = 2 * tile_b * (in_p * x_p.dtype.itemsize
                             + out_p * jnp.dtype(out_dtype).itemsize)
    act_bytes = 4 * tile_b * max_dim_p * 4
    cap = int(_vmem_cap_bytes() * 0.85)
    vmem_limit = int(min(max(weight_bytes + io_bytes + act_bytes + (4 << 20),
                             8 << 20), cap))

    kernel = functools.partial(_mlp_fused_kernel,
                               n_layers=n_layers, n_subtiles=n_subtiles)
    return pl.pallas_call(
        kernel,
        out_shape=out_shape,
        grid=(B_p // tile_b,),
        in_specs=in_specs,
        out_specs=out_specs,
        compiler_params=pltpu.CompilerParams(
            dimension_semantics=("parallel",),    # batch tiles shard across TCs
            vmem_limit_bytes=vmem_limit),
    )(*inputs)


def _mlp_forward_impl(x, padded_params, *, out_dim, batch_tile=512):
    """x: [B, In]; padded_params: tuple of lane-dense (W[in_p,out_p], b[1,out_p])."""
    B, In = x.shape
    in_p = padded_params[0][0].shape[0]

    tile_b = _round_up(min(batch_tile, _round_up(B, 8)), 8)
    # Guarantee >=2 batch tiles where possible so ("parallel",) can shard the
    # grid across v7x's two TensorCores (no-op on single-TC v5e/v6e).
    if _round_up(B, tile_b) // tile_b < 2 and tile_b > 8:
        tile_b = max(_round_up(tile_b // 2, 8), 8)
    B_p = _round_up(B, tile_b)

    # Only x is padded per call (it changes every call); padding is exact:
    # padded input columns hit zero weight rows, padded output columns have
    # zero weights + zero bias, so ReLU keeps them zero layer after layer.
    x_p = jnp.pad(x, ((0, B_p - B), (0, in_p - In)))

    # Greedy layer chunking: keep each chunk's resident weights within ~55% of
    # physical VMEM.  For small MLPs this is a single fully fused call.
    resident_cap = int(_vmem_cap_bytes() * 0.55)
    chunks, cur, cur_bytes = [], [], 0
    for (w_p, b_p) in padded_params:
        nbytes = w_p.size * w_p.dtype.itemsize + b_p.size * b_p.dtype.itemsize
        if cur and cur_bytes + nbytes > resident_cap:
            chunks.append(cur)
            cur, cur_bytes = [], 0
        cur.append((w_p, b_p))
        cur_bytes += nbytes
    chunks.append(cur)
    # TODO(synk): a single layer whose weight alone exceeds ~55% of VMEM would
    # need K/N tiling (pltpu.emit_pipeline); not required at these sizes.

    h = x_p
    for chunk in chunks:
        h = _fused_layers_call(h, chunk, tile_b, x.dtype)
    return h[:B, :out_dim]


mlp_forward = jax.jit(_mlp_forward_impl, static_argnames=("out_dim", "batch_tile"))


def prepare_mlp_params(params, *, matmul_dtype=jnp.bfloat16):
    """Pad each (W[in,out], b[1,out]) ONCE to lane-dense multiple-of-128 feature
    dims and pre-cast weights to the MXU operand dtype (bf16 by default — the
    MXU is bf16-native on v5e/v6e/v7x); biases stay f32 for the VPU epilogue.
    Call once and reuse the result for every forward call."""
    padded = []
    for (w, b) in params:
        in_p = _round_up(w.shape[0], 128)
        out_p = _round_up(w.shape[1], 128)
        w_p = jnp.pad(w, ((0, in_p - w.shape[0]),
                          (0, out_p - w.shape[1]))).astype(matmul_dtype)
        b_p = jnp.pad(b, ((0, 0), (0, out_p - b.shape[1]))).astype(jnp.float32)
        padded.append((w_p, b_p))
    out_dim = int(params[-1][0].shape[1])
    return tuple(padded), out_dim


def init_mlp_params(key, layer_sizes, dtype=jnp.float32):
    """Deterministic init mirroring torch.nn.Linear shapes.

    Returns tuple of (W[in,out], b[1,out]) plus the eta scalar.
    """
    params = []
    for i in range(len(layer_sizes) - 1):
        fan_in, fan_out = layer_sizes[i], layer_sizes[i + 1]
        key, kw, kb = jax.random.split(key, 3)
        bound = 1.0 / math.sqrt(fan_in)
        w = jax.random.uniform(kw, (fan_in, fan_out), dtype, -bound, bound)
        b = jax.random.uniform(kb, (1, fan_out), dtype, -bound, bound)
        params.append((w, b))
    # TODO(synk): `eta` is an nn.Parameter in the torch module but unused in forward.
    eta = jnp.ones((1,), dtype)
    return tuple(params), eta


if __name__ == "__main__":
    key = jax.random.PRNGKey(0)
    layer_sizes = [32, 64, 48, 16]   # (input_size, hid1, hid2, output_size)
    batch = 8

    key, kx = jax.random.split(key)
    x = jax.random.normal(kx, (batch, layer_sizes[0]), jnp.float32)
    params, eta = init_mlp_params(key, layer_sizes)

    # Pure-JAX reference: Linear -> ReLU for every layer, including the last
    # (the torch forward applies `self.activation` to the final Linear too).
    ref = x
    for (w, b) in params:
        ref = jnp.maximum(ref @ w + b, 0.0)

    # f32 MXU operands: exact check.
    p_f32, out_dim = prepare_mlp_params(params, matmul_dtype=jnp.float32)
    out = mlp_forward(x, p_f32, out_dim=out_dim)
    jax.block_until_ready(out)
    assert out.shape == (batch, layer_sizes[-1])
    assert jnp.allclose(out, ref, atol=1e-5, rtol=1e-5), "f32 path mismatch"

    # bf16 MXU operands (default / recommended): f32 accumulation + epilogue.
    p_bf16, out_dim = prepare_mlp_params(params)            # bf16 default
    out_bf16 = mlp_forward(x, p_bf16, out_dim=out_dim)
    jax.block_until_ready(out_bf16)
    assert out_bf16.shape == (batch, layer_sizes[-1])
    assert jnp.allclose(out_bf16, ref, atol=5e-2, rtol=5e-2), "bf16 path mismatch"

    print("KERNEL_OK")
</pallas_src>

<mosaic_0001>
module attributes {stable_mosaic.version = 11 : i64} {
  func.func @_mlp_fused_kernel(%arg0: i32, %arg1: memref<8x128xf32, #tpu.memory_space<vmem>>, %arg2: memref<128x128xf32, #tpu.memory_space<vmem>>, %arg3: memref<1x128xf32, #tpu.memory_space<vmem>>, %arg4: memref<128x128xf32, #tpu.memory_space<vmem>>, %arg5: memref<1x128xf32, #tpu.memory_space<vmem>>, %arg6: memref<128x128xf32, #tpu.memory_space<vmem>>, %arg7: memref<1x128xf32, #tpu.memory_space<vmem>>, %arg8: memref<8x128xf32, #tpu.memory_space<vmem>>) attributes {dimension_semantics = [#tpu.dimension_semantics<parallel>], iteration_bounds = array<i64: 1>, scalar_prefetch = 0 : i64, scratch_operands = 0 : i64, tpu.core_type = #tpu.core_type<tc>, window_params = [{transform_indices = @transform_0, window_bounds = array<i64: 8, 128>}, {pipeline_mode = #tpu.pipeline_mode<synchronous>, transform_indices = @transform_1, window_bounds = array<i64: 128, 128>}, {pipeline_mode = #tpu.pipeline_mode<synchronous>, transform_indices = @transform_2, window_bounds = array<i64: 1, 128>}, {pipeline_mode = #tpu.pipeline_mode<synchronous>, transform_indices = @transform_3, window_bounds = array<i64: 128, 128>}, {pipeline_mode = #tpu.pipeline_mode<synchronous>, transform_indices = @transform_4, window_bounds = array<i64: 1, 128>}, {pipeline_mode = #tpu.pipeline_mode<synchronous>, transform_indices = @transform_5, window_bounds = array<i64: 128, 128>}, {pipeline_mode = #tpu.pipeline_mode<synchronous>, transform_indices = @transform_6, window_bounds = array<i64: 1, 128>}, {transform_indices = @transform_7, window_bounds = array<i64: 8, 128>}]} {
    %c0 = arith.constant 0 : index
    %c0_0 = arith.constant 0 : index
    %0 = vector.load %arg1[%c0, %c0_0] : memref<8x128xf32, #tpu.memory_space<vmem>>, vector<8x128xf32>
    %c0_1 = arith.constant 0 : index
    %c0_2 = arith.constant 0 : index
    %1 = vector.load %arg2[%c0_1, %c0_2] : memref<128x128xf32, #tpu.memory_space<vmem>>, vector<128x128xf32>
    %cst = arith.constant dense<0.000000e+00> : vector<8x128xf32>
    %2 = tpu.matmul %0, %1, %cst {dimension_numbers = #tpu.dot_dimension_numbers<[1], [0], [0], [1], [0, 0, 1, 1], [], []>} : vector<8x128xf32>, vector<128x128xf32>, vector<8x128xf32> -> vector<8x128xf32>
    %c0_3 = arith.constant 0 : index
    %c0_4 = arith.constant 0 : index
    %3 = vector.load %arg3[%c0_3, %c0_4] : memref<1x128xf32, #tpu.memory_space<vmem>>, vector<1x128xf32>
    %4 = vector.broadcast %3 : vector<1x128xf32> to vector<8x128xf32>
    %5 = arith.addf %2, %4 : vector<8x128xf32>
    %cst_5 = arith.constant 0.000000e+00 : f32
    %6 = vector.broadcast %cst_5 : f32 to vector<8x128xf32>
    %7 = arith.maximumf %5, %6 : vector<8x128xf32>
    %c0_6 = arith.constant 0 : index
    %c0_7 = arith.constant 0 : index
    %8 = vector.load %arg4[%c0_6, %c0_7] : memref<128x128xf32, #tpu.memory_space<vmem>>, vector<128x128xf32>
    %cst_8 = arith.constant dense<0.000000e+00> : vector<8x128xf32>
    %9 = tpu.matmul %7, %8, %cst_8 {dimension_numbers = #tpu.dot_dimension_numbers<[1], [0], [0], [1], [0, 0, 1, 1], [], []>} : vector<8x128xf32>, vector<128x128xf32>, vector<8x128xf32> -> vector<8x128xf32>
    %c0_9 = arith.constant 0 : index
    %c0_10 = arith.constant 0 : index
    %10 = vector.load %arg5[%c0_9, %c0_10] : memref<1x128xf32, #tpu.memory_space<vmem>>, vector<1x128xf32>
    %11 = vector.broadcast %10 : vector<1x128xf32> to vector<8x128xf32>
    %12 = arith.addf %9, %11 : vector<8x128xf32>
    %cst_11 = arith.constant 0.000000e+00 : f32
    %13 = vector.broadcast %cst_11 : f32 to vector<8x128xf32>
    %14 = arith.maximumf %12, %13 : vector<8x128xf32>
    %c0_12 = arith.constant 0 : index
    %c0_13 = arith.constant 0 : index
    %15 = vector.load %arg6[%c0_12, %c0_13] : memref<128x128xf32, #tpu.memory_space<vmem>>, vector<128x128xf32>
    %cst_14 = arith.constant dense<0.000000e+00> : vector<8x128xf32>
    %16 = tpu.matmul %14, %15, %cst_14 {dimension_numbers = #tpu.dot_dimension_numbers<[1], [0], [0], [1], [0, 0, 1, 1], [], []>} : vector<8x128xf32>, vector<128x128xf32>, vector<8x128xf32> -> vector<8x128xf32>
    %c0_15 = arith.constant 0 : index
    %c0_16 = arith.constant 0 : index
    %17 = vector.load %arg7[%c0_15, %c0_16] : memref<1x128xf32, #tpu.memory_space<vmem>>, vector<1x128xf32>
    %18 = vector.broadcast %17 : vector<1x128xf32> to vector<8x128xf32>
    %19 = arith.addf %16, %18 : vector<8x128xf32>
    %cst_17 = arith.constant 0.000000e+00 : f32
    %20 = vector.broadcast %cst_17 : f32 to vector<8x128xf32>
    %21 = arith.maximumf %19, %20 : vector<8x128xf32>
    %c0_18 = arith.constant 0 : index
    %c0_19 = arith.constant 0 : index
    %22 = vector.load %arg8[%c0_18, %c0_19] : memref<8x128xf32, #tpu.memory_space<vmem>>, vector<8x128xf32>
    tpu.vector_store %arg8[%c0_18, %c0_19], %21 {strides = array<i32>} : memref<8x128xf32, #tpu.memory_space<vmem>>, vector<8x128xf32>,
    return
  }
  func.func @transform_0(%arg0: i32) -> (i32, i32) {
    %c0_i32 = arith.constant 0 : i32
    %c0_i32_0 = arith.constant 0 : i32
    return %arg0, %c0_i32 : i32, i32
  }
  func.func @transform_1(%arg0: i32) -> (i32, i32) {
    %c0_i32 = arith.constant 0 : i32
    %c0_i32_0 = arith.constant 0 : i32
    %c0_i32_1 = arith.constant 0 : i32
    return %c0_i32, %c0_i32_0 : i32, i32
  }
  func.func @transform_2(%arg0: i32) -> (i32, i32) {
    %c0_i32 = arith.constant 0 : i32
    %c0_i32_0 = arith.constant 0 : i32
    %c0_i32_1 = arith.constant 0 : i32
    return %c0_i32, %c0_i32_0 : i32, i32
  }
  func.func @transform_3(%arg0: i32) -> (i32, i32) {
    %c0_i32 = arith.constant 0 : i32
    %c0_i32_0 = arith.constant 0 : i32
    %c0_i32_1 = arith.constant 0 : i32
    return %c0_i32, %c0_i32_0 : i32, i32
  }
  func.func @transform_4(%arg0: i32) -> (i32, i32) {
    %c0_i32 = arith.constant 0 : i32
    %c0_i32_0 = arith.constant 0 : i32
    %c0_i32_1 = arith.constant 0 : i32
    return %c0_i32, %c0_i32_0 : i32, i32
  }
  func.func @transform_5(%arg0: i32) -> (i32, i32) {
    %c0_i32 = arith.constant 0 : i32
    %c0_i32_0 = arith.constant 0 : i32
    %c0_i32_1 = arith.constant 0 : i32
    return %c0_i32, %c0_i32_0 : i32, i32
  }
  func.func @transform_6(%arg0: i32) -> (i32, i32) {
    %c0_i32 = arith.constant 0 : i32
    %c0_i32_0 = arith.constant 0 : i32
    %c0_i32_1 = arith.constant 0 : i32
    return %c0_i32, %c0_i32_0 : i32, i32
  }
  func.func @transform_7(%arg0: i32) -> (i32, i32) {
    %c0_i32 = arith.constant 0 : i32
    %c0_i32_0 = arith.constant 0 : i32
    return %arg0, %c0_i32 : i32, i32
  }
}

</mosaic_0001>

<llo_original>
// kernel: _mlp_forward_impl.1
$region0: #{_mlp_forward_impl.1}
  #allocation0 [shape = 'u32[]', space=smem, size = 0x4, offset = 0x4, fixed_abs, tag = 'smem constant byte address 0x4 - core index']
  #allocation1 [shape = 'u32[144,128]{1,0:T(1,128)}', space=vmem, size = 0x12000, scoped, tag = 'internal scratch']
  %s0 = inlined_call_operand.vmem [shape: f32[8,128], index: 0, kind: input, shape index: {}]
  %s1 = inlined_call_operand.hbm [shape: f32[128,128], index: 1, kind: input, shape index: {}]
  %s2 = inlined_call_operand.vmem [shape: f32[1,128], index: 2, kind: input, shape index: {}]
  %s3 = inlined_call_operand.hbm [shape: f32[128,128], index: 3, kind: input, shape index: {}]
  %s4 = inlined_call_operand.vmem [shape: f32[1,128], index: 4, kind: input, shape index: {}]
  %s5 = inlined_call_operand.hbm [shape: f32[128,128], index: 5, kind: input, shape index: {}]
  %s6 = inlined_call_operand.vmem [shape: f32[1,128], index: 6, kind: input, shape index: {}]
  %s7 = inlined_call_operand.hbm [shape: f32[8,128], index: 7, kind: output, shape index: {}]
  %s8 = sld [smem:[#allocation0]]
  $region50: #{_mlp_forward_impl.1} parent=0
    _
  %s10 = ssub.s32 1, %s8
  %s11 = scalar_select 0, %s10, %s8
  $region1: #{_mlp_forward_impl.1} parent=0
    #allocation2 [shape = 'u8[65536]{0}', space=vmem, size = 0x10000, scoped, tag = 'input window, operand 1, single buffered']
    #allocation3 [shape = 's32[1]{0}', space=sflag, size = 0x4, scoped, tag = 'scoped memory for _mlp_forward_impl.1']
    #allocation4 [shape = 's32[1]{0}', space=sflag, size = 0x4, scoped, tag = 'scoped memory for _mlp_forward_impl.1']
    #allocation5 [shape = 'u8[65536]{0}', space=vmem, size = 0x10000, scoped, tag = 'input window, operand 3, single buffered']
    #allocation6 [shape = 's32[1]{0}', space=sflag, size = 0x4, scoped, tag = 'scoped memory for _mlp_forward_impl.1']
    #allocation7 [shape = 'u8[65536]{0}', space=vmem, size = 0x10000, scoped, tag = 'input window, operand 5, single buffered']
    #allocation8 [shape = 'u8[4096]{0}', space=vmem, size = 0x1000, scoped, tag = 'output window, operand 0, single buffered']
    %12 = vsyncpa [#allocation3], 0
    %13 = vsyncpa [#allocation6], 0
    %14 = vsyncpa [#allocation4], 0
    // Predicated region
    $region2: #{_mlp_forward_impl.1} parent=1 // pred_check
      _
    $region3: #{_mlp_forward_impl.1} parent=1 // pred_check_branch
      %16 = sbr.rel (0) target = $region5
    $region4: #{_mlp_forward_impl.1} parent=1 // pred_region
      _
    $region5: #{_mlp_forward_impl.1} parent=1 // pred_fallthru
      _
    // Predicated region
    $region6: #{_mlp_forward_impl.1} parent=1 // pred_check
      _
    $region7: #{_mlp_forward_impl.1} parent=1 // pred_check_branch
      %18 = sbr.rel (0) target = $region9
    $region8: #{_mlp_forward_impl.1} parent=1 // pred_region
      %s20 = ssub.s32 2048, 2048
      %21 = vsyncadd [#allocation3], %s20
      %s22 = sshll.u32 [#allocation2], 4
      %s23 = int_to_ptr.vmem [resolvable:$true] %s22
      %28 = dma.hbm_to_vmem [thread:$0]  %s1, 2048, %s23, [#allocation3], 128, 128, 8
    $region9: #{_mlp_forward_impl.1} parent=1 // pred_fallthru
      _
    // Predicated region
    $region10: #{_mlp_forward_impl.1} parent=1 // pred_check
      _
    $region11: #{_mlp_forward_impl.1} parent=1 // pred_check_branch
      %30 = sbr.rel (0) target = $region13
    $region12: #{_mlp_forward_impl.1} parent=1 // pred_region
      _
    $region13: #{_mlp_forward_impl.1} parent=1 // pred_fallthru
      _
    // Predicated region
    $region14: #{_mlp_forward_impl.1} parent=1 // pred_check
      _
    $region15: #{_mlp_forward_impl.1} parent=1 // pred_check_branch
      %32 = sbr.rel (0) target = $region17
    $region16: #{_mlp_forward_impl.1} parent=1 // pred_region
      %s34 = ssub.s32 2048, 2048
      %35 = vsyncadd [#allocation6], %s34
      %s36 = sshll.u32 [#allocation5], 4
      %s37 = int_to_ptr.vmem [resolvable:$true] %s36
      %42 = dma.hbm_to_vmem [thread:$0]  %s3, 2048, %s37, [#allocation6], 128, 128, 8
    $region17: #{_mlp_forward_impl.1} parent=1 // pred_fallthru
      _
    // Predicated region
    $region18: #{_mlp_forward_impl.1} parent=1 // pred_check
      _
    $region19: #{_mlp_forward_impl.1} parent=1 // pred_check_branch
      %44 = sbr.rel (0) target = $region21
    $region20: #{_mlp_forward_impl.1} parent=1 // pred_region
      _
    $region21: #{_mlp_forward_impl.1} parent=1 // pred_fallthru
      _
    // Predicated region
    $region22: #{_mlp_forward_impl.1} parent=1 // pred_check
      _
    $region23: #{_mlp_forward_impl.1} parent=1 // pred_check_branch
      %46 = sbr.rel (0) target = $region25
    $region24: #{_mlp_forward_impl.1} parent=1 // pred_region
      %s48 = ssub.s32 2048, 2048
      %49 = vsyncadd [#allocation6], %s48
      %s50 = sshll.u32 [#allocation7], 4
      %s51 = int_to_ptr.vmem [resolvable:$true] %s50
      %56 = dma.hbm_to_vmem [thread:$0]  %s5, 2048, %s51, [#allocation6], 128, 128, 8
    $region25: #{_mlp_forward_impl.1} parent=1 // pred_fallthru
      _
    // Predicated region
    $region26: #{_mlp_forward_impl.1} parent=1 // pred_check
      _
    $region27: #{_mlp_forward_impl.1} parent=1 // pred_check_branch
      %58 = sbr.rel (0) target = $region29
    $region28: #{_mlp_forward_impl.1} parent=1 // pred_region
      _
    $region29: #{_mlp_forward_impl.1} parent=1 // pred_fallthru
      _
    // Predicated region
    $region30: #{_mlp_forward_impl.1} parent=1 // pred_check
      _
    $region31: #{_mlp_forward_impl.1} parent=1 // pred_check_branch
      %60 = sbr.rel (0) target = $region33
    $region32: #{_mlp_forward_impl.1} parent=1 // pred_region
      %61 = dma.done [#allocation3], 2048
    $region33: #{_mlp_forward_impl.1} parent=1 // pred_fallthru
      _
    // Predicated region
    $region34: #{_mlp_forward_impl.1} parent=1 // pred_check
      _
    $region35: #{_mlp_forward_impl.1} parent=1 // pred_check_branch
      %63 = sbr.rel (0) target = $region37
    $region36: #{_mlp_forward_impl.1} parent=1 // pred_region
      %64 = dma.done [#allocation6], 2048
    $region37: #{_mlp_forward_impl.1} parent=1 // pred_fallthru
      _
    // Predicated region
    $region38: #{_mlp_forward_impl.1} parent=1 // pred_check
      _
    $region39: #{_mlp_forward_impl.1} parent=1 // pred_check_branch
      %66 = sbr.rel (0) target = $region41
    $region40: #{_mlp_forward_impl.1} parent=1 // pred_region
      %67 = dma.done [#allocation6], 2048
    $region41: #{_mlp_forward_impl.1} parent=1 // pred_fallthru
      _
    %v68 = vld [vmem:[%s0] sm:$0xff]
    %v69 = vld [vmem:[#allocation2] sm:$0xff]
    %v70 = vld [vmem:[#allocation2 + $0x8] sm:$0xff]
    %v71 = vld [vmem:[#allocation2 + $0x10] sm:$0xff]
    %v72 = vld [vmem:[#allocation2 + $0x18] sm:$0xff]
    %v73 = vld [vmem:[#allocation2 + $0x20] sm:$0xff]
    %v74 = vld [vmem:[#allocation2 + $0x28] sm:$0xff]
    %v75 = vld [vmem:[#allocation2 + $0x30] sm:$0xff]
    %v76 = vld [vmem:[#allocation2 + $0x38] sm:$0xff]
    %v77 = vld [vmem:[#allocation2 + $0x40] sm:$0xff]
    %v78 = vld [vmem:[#allocation2 + $0x48] sm:$0xff]
    %v79 = vld [vmem:[#allocation2 + $0x50] sm:$0xff]
    %v80 = vld [vmem:[#allocation2 + $0x58] sm:$0xff]
    %v81 = vld [vmem:[#allocation2 + $0x60] sm:$0xff]
    %v82 = vld [vmem:[#allocation2 + $0x68] sm:$0xff]
    %v83 = vld [vmem:[#allocation2 + $0x70] sm:$0xff]
    %v84 = vld [vmem:[#allocation2 + $0x78] sm:$0xff]
    %v85 = vld [vmem:[%s2] sm:$0x1]
    %v87 = vlaneseq
    %v88 = vshrl.u32 %v87, 7
    %v89 = vsub.s32 0, %v88
    %v90 = vrot.slane %v85, %v89
    %92 = vmatprep.subr.mxu0 0.0
    %93 = vmatpush1.msra.mxu0 %v69
    %94 = vmatprep.subr.mxu0 0.0
    %95 = vmatpush1.msra.mxu0 %v70
    %96 = vmatprep.subr.mxu0 0.0
    %97 = vmatpush1.msra.mxu0 %v71
    %98 = vmatprep.subr.mxu0 0.0
    %99 = vmatpush1.msra.mxu0 %v72
    %100 = vmatprep.subr.mxu0 0.0
    %101 = vmatpush1.msra.mxu0 %v73
    %102 = vmatprep.subr.mxu0 0.0
    %103 = vmatpush1.msra.mxu0 %v74
    %104 = vmatprep.subr.mxu0 0.0
    %105 = vmatpush1.msra.mxu0 %v75
    %106 = vmatprep.subr.mxu0 0.0
    %107 = vmatpush1.msra.mxu0 %v76
    %108 = vmatprep.subr.mxu0 0.0
    %109 = vmatpush1.msra.mxu0 %v77
    %110 = vmatprep.subr.mxu0 0.0
    %111 = vmatpush1.msra.mxu0 %v78
    %112 = vmatprep.subr.mxu0 0.0
    %113 = vmatpush1.msra.mxu0 %v79
    %114 = vmatprep.subr.mxu0 0.0
    %115 = vmatpush1.msra.mxu0 %v80
    %116 = vmatprep.subr.mxu0 0.0
    %117 = vmatpush1.msra.mxu0 %v81
    %118 = vmatprep.subr.mxu0 0.0
    %119 = vmatpush1.msra.mxu0 %v82
    %120 = vmatprep.subr.mxu0 0.0
    %121 = vmatpush1.msra.mxu0 %v83
    %122 = vmatprep.subr.mxu0 0.0
    %123 = vmatpush1.msra.mxu0 %v84
    %124 = vmatprep.subr.mxu0 0.0
    %125 = vmatpush1.msra.mxu0 0.0
    %126 = vmatprep.subr.mxu0 0.0
    %127 = vmatpush1.msra.mxu0 0.0
    %128 = vmatprep.subr.mxu0 0.0
    %129 = vmatpush1.msra.mxu0 0.0
    %130 = vmatprep.subr.mxu0 0.0
    %131 = vmatpush1.msra.mxu0 0.0
    %132 = vmatprep.subr.mxu0 0.0
    %133 = vmatpush1.msra.mxu0 0.0
    %134 = vmatprep.subr.mxu0 0.0
    %135 = vmatpush1.msra.mxu0 0.0
    %136 = vmatprep.subr.mxu0 0.0
    %137 = vmatpush1.msra.mxu0 0.0
    %138 = vmatprep.subr.mxu0 0.0
    %139 = vmatpush1.msra.mxu0 0.0
    %140 = vmatprep.subr.mxu0 0.0
    %141 = vmatpush1.msra.mxu0 0.0
    %142 = vmatprep.subr.mxu0 0.0
    %143 = vmatpush1.msra.mxu0 0.0
    %144 = vmatprep.subr.mxu0 0.0
    %145 = vmatpush1.msra.mxu0 0.0
    %146 = vmatprep.subr.mxu0 0.0
    %147 = vmatpush1.msra.mxu0 0.0
    %148 = vmatprep.subr.mxu0 0.0
    %149 = vmatpush1.msra.mxu0 0.0
    %150 = vmatprep.subr.mxu0 0.0
    %151 = vmatpush1.msra.mxu0 0.0
    %152 = vmatprep.subr.mxu0 0.0
    %153 = vmatpush1.msra.mxu0 0.0
    %154 = vmatprep.subr.mxu0 0.0
    %155 = vmatpush1.msra.mxu0 0.0
    %156 = vmatprep.mubr.f32.mxu0 0.0
    %157 = vmatmul.mubr.f32.gmra.mrb[0].mxu0 %v68
    %v158 = vpop.f32.mrb[0].mxu0
    %v159 = vadd.f32 %v90, %v158
    %v160 = vpop.f32.mrb[0].mxu0
    %161 = vdwg.mxu0
    %v162 = vmax.f32 %v159, 0.0
    %v163 = vld [vmem:[#allocation5] sm:$0xff]
    %v164 = vld [vmem:[#allocation5 + $0x8] sm:$0xff]
    %v165 = vld [vmem:[#allocation5 + $0x10] sm:$0xff]
    %v166 = vld [vmem:[#allocation5 + $0x18] sm:$0xff]
    %v167 = vld [vmem:[#allocation5 + $0x20] sm:$0xff]
    %v168 = vld [vmem:[#allocation5 + $0x28] sm:$0xff]
    %v169 = vld [vmem:[#allocation5 + $0x30] sm:$0xff]
    %v170 = vld [vmem:[#allocation5 + $0x38] sm:$0xff]
    %v171 = vld [vmem:[#allocation5 + $0x40] sm:$0xff]
    %v172 = vld [vmem:[#allocation5 + $0x48] sm:$0xff]
    %v173 = vld [vmem:[#allocation5 + $0x50] sm:$0xff]
    %v174 = vld [vmem:[#allocation5 + $0x58] sm:$0xff]
    %v175 = vld [vmem:[#allocation5 + $0x60] sm:$0xff]
    %v176 = vld [vmem:[#allocation5 + $0x68] sm:$0xff]
    %v177 = vld [vmem:[#allocation5 + $0x70] sm:$0xff]
    %v178 = vld [vmem:[#allocation5 + $0x78] sm:$0xff]
    %v179 = vld [vmem:[%s4] sm:$0x1]
    %v181 = vlaneseq
    %v182 = vshrl.u32 %v181, 7
    %v183 = vsub.s32 0, %v182
    %v184 = vrot.slane %v179, %v183
    %186 = vmatprep.subr.mxu0 0.0
    %187 = vmatpush1.msra.mxu0 %v163
    %188 = vmatprep.subr.mxu0 0.0
    %189 = vmatpush1.msra.mxu0 %v164
    %190 = vmatprep.subr.mxu0 0.0
    %191 = vmatpush1.msra.mxu0 %v165
    %192 = vmatprep.subr.mxu0 0.0
    %193 = vmatpush1.msra.mxu0 %v166
    %194 = vmatprep.subr.mxu0 0.0
    %195 = vmatpush1.msra.mxu0 %v167
    %196 = vmatprep.subr.mxu0 0.0
    %197 = vmatpush1.msra.mxu0 %v168
    %198 = vmatprep.subr.mxu0 0.0
    %199 = vmatpush1.msra.mxu0 %v169
    %200 = vmatprep.subr.mxu0 0.0
    %201 = vmatpush1.msra.mxu0 %v170
    %202 = vmatprep.subr.mxu0 0.0
    %203 = vmatpush1.msra.mxu0 %v171
    %204 = vmatprep.subr.mxu0 0.0
    %205 = vmatpush1.msra.mxu0 %v172
    %206 = vmatprep.subr.mxu0 0.0
    %207 = vmatpush1.msra.mxu0 %v173
    %208 = vmatprep.subr.mxu0 0.0
    %209 = vmatpush1.msra.mxu0 %v174
    %210 = vmatprep.subr.mxu0 0.0
    %211 = vmatpush1.msra.mxu0 %v175
    %212 = vmatprep.subr.mxu0 0.0
    %213 = vmatpush1.msra.mxu0 %v176
    %214 = vmatprep.subr.mxu0 0.0
    %215 = vmatpush1.msra.mxu0 %v177
    %216 = vmatprep.subr.mxu0 0.0
    %217 = vmatpush1.msra.mxu0 %v178
    %218 = vmatprep.subr.mxu0 0.0
    %219 = vmatpush1.msra.mxu0 0.0
    %220 = vmatprep.subr.mxu0 0.0
    %221 = vmatpush1.msra.mxu0 0.0
    %222 = vmatprep.subr.mxu0 0.0
    %223 = vmatpush1.msra.mxu0 0.0
    %224 = vmatprep.subr.mxu0 0.0
    %225 = vmatpush1.msra.mxu0 0.0
    %226 = vmatprep.subr.mxu0 0.0
    %227 = vmatpush1.msra.mxu0 0.0
    %228 = vmatprep.subr.mxu0 0.0
    %229 = vmatpush1.msra.mxu0 0.0
    %230 = vmatprep.subr.mxu0 0.0
    %231 = vmatpush1.msra.mxu0 0.0
    %232 = vmatprep.subr.mxu0 0.0
    %233 = vmatpush1.msra.mxu0 0.0
    %234 = vmatprep.subr.mxu0 0.0
    %235 = vmatpush1.msra.mxu0 0.0
    %236 = vmatprep.subr.mxu0 0.0
    %237 = vmatpush1.msra.mxu0 0.0
    %238 = vmatprep.subr.mxu0 0.0
    %239 = vmatpush1.msra.mxu0 0.0
    %240 = vmatprep.subr.mxu0 0.0
    %241 = vmatpush1.msra.mxu0 0.0
    %242 = vmatprep.subr.mxu0 0.0
    %243 = vmatpush1.msra.mxu0 0.0
    %244 = vmatprep.subr.mxu0 0.0
    %245 = vmatpush1.msra.mxu0 0.0
    %246 = vmatprep.subr.mxu0 0.0
    %247 = vmatpush1.msra.mxu0 0.0
    %248 = vmatprep.subr.mxu0 0.0
    %249 = vmatpush1.msra.mxu0 0.0
    %250 = vmatprep.mubr.f32.mxu0 0.0
    %251 = vmatmul.mubr.f32.gmra.mrb[0].mxu0 %v162
    %v252 = vpop.f32.mrb[0].mxu0
    %v253 = vadd.f32 %v184, %v252
    %v254 = vpop.f32.mrb[0].mxu0
    %255 = vdwg.mxu0
    %v256 = vmax.f32 %v253, 0.0
    %v257 = vld [vmem:[#allocation7] sm:$0xff]
    %v258 = vld [vmem:[#allocation7 + $0x8] sm:$0xff]
    %v259 = vld [vmem:[#allocation7 + $0x10] sm:$0xff]
    %v260 = vld [vmem:[#allocation7 + $0x18] sm:$0xff]
    %v261 = vld [vmem:[#allocation7 + $0x20] sm:$0xff]
    %v262 = vld [vmem:[#allocation7 + $0x28] sm:$0xff]
    %v263 = vld [vmem:[#allocation7 + $0x30] sm:$0xff]
    %v264 = vld [vmem:[#allocation7 + $0x38] sm:$0xff]
    %v265 = vld [vmem:[#allocation7 + $0x40] sm:$0xff]
    %v266 = vld [vmem:[#allocation7 + $0x48] sm:$0xff]
    %v267 = vld [vmem:[#allocation7 + $0x50] sm:$0xff]
    %v268 = vld [vmem:[#allocation7 + $0x58] sm:$0xff]
    %v269 = vld [vmem:[#allocation7 + $0x60] sm:$0xff]
    %v270 = vld [vmem:[#allocation7 + $0x68] sm:$0xff]
    %v271 = vld [vmem:[#allocation7 + $0x70] sm:$0xff]
    %v272 = vld [vmem:[#allocation7 + $0x78] sm:$0xff]
    %v273 = vld [vmem:[%s6] sm:$0x1]
    %v275 = vlaneseq
    %v276 = vshrl.u32 %v275, 7
    %v277 = vsub.s32 0, %v276
    %v278 = vrot.slane %v273, %v277
    %280 = vmatprep.subr.mxu0 0.0
    %281 = vmatpush1.msra.mxu0 %v257
    %282 = vmatprep.subr.mxu0 0.0
    %283 = vmatpush1.msra.mxu0 %v258
    %284 = vmatprep.subr.mxu0 0.0
    %285 = vmatpush1.msra.mxu0 %v259
    %286 = vmatprep.subr.mxu0 0.0
    %287 = vmatpush1.msra.mxu0 %v260
    %288 = vmatprep.subr.mxu0 0.0
    %289 = vmatpush1.msra.mxu0 %v261
    %290 = vmatprep.subr.mxu0 0.0
    %291 = vmatpush1.msra.mxu0 %v262
    %292 = vmatprep.subr.mxu0 0.0
    %293 = vmatpush1.msra.mxu0 %v263
    %294 = vmatprep.subr.mxu0 0.0
    %295 = vmatpush1.msra.mxu0 %v264
    %296 = vmatprep.subr.mxu0 0.0
    %297 = vmatpush1.msra.mxu0 %v265
    %298 = vmatprep.subr.mxu0 0.0
    %299 = vmatpush1.msra.mxu0 %v266
    %300 = vmatprep.subr.mxu0 0.0
    %301 = vmatpush1.msra.mxu0 %v267
    %302 = vmatprep.subr.mxu0 0.0
    %303 = vmatpush1.msra.mxu0 %v268
    %304 = vmatprep.subr.mxu0 0.0
    %305 = vmatpush1.msra.mxu0 %v269
    %306 = vmatprep.subr.mxu0 0.0
    %307 = vmatpush1.msra.mxu0 %v270
    %308 = vmatprep.subr.mxu0 0.0
    %309 = vmatpush1.msra.mxu0 %v271
    %310 = vmatprep.subr.mxu0 0.0
    %311 = vmatpush1.msra.mxu0 %v272
    %312 = vmatprep.subr.mxu0 0.0
    %313 = vmatpush1.msra.mxu0 0.0
    %314 = vmatprep.subr.mxu0 0.0
    %315 = vmatpush1.msra.mxu0 0.0
    %316 = vmatprep.subr.mxu0 0.0
    %317 = vmatpush1.msra.mxu0 0.0
    %318 = vmatprep.subr.mxu0 0.0
    %319 = vmatpush1.msra.mxu0 0.0
    %320 = vmatprep.subr.mxu0 0.0
    %321 = vmatpush1.msra.mxu0 0.0
    %322 = vmatprep.subr.mxu0 0.0
    %323 = vmatpush1.msra.mxu0 0.0
    %324 = vmatprep.subr.mxu0 0.0
    %325 = vmatpush1.msra.mxu0 0.0
    %326 = vmatprep.subr.mxu0 0.0
    %327 = vmatpush1.msra.mxu0 0.0
    %328 = vmatprep.subr.mxu0 0.0
    %329 = vmatpush1.msra.mxu0 0.0
    %330 = vmatprep.subr.mxu0 0.0
    %331 = vmatpush1.msra.mxu0 0.0
    %332 = vmatprep.subr.mxu0 0.0
    %333 = vmatpush1.msra.mxu0 0.0
    %334 = vmatprep.subr.mxu0 0.0
    %335 = vmatpush1.msra.mxu0 0.0
    %336 = vmatprep.subr.mxu0 0.0
    %337 = vmatpush1.msra.mxu0 0.0
    %338 = vmatprep.subr.mxu0 0.0
    %339 = vmatpush1.msra.mxu0 0.0
    %340 = vmatprep.subr.mxu0 0.0
    %341 = vmatpush1.msra.mxu0 0.0
    %342 = vmatprep.subr.mxu0 0.0
    %343 = vmatpush1.msra.mxu0 0.0
    %344 = vmatprep.mubr.f32.mxu0 0.0
    %345 = vmatmul.mubr.f32.gmra.mrb[0].mxu0 %v256
    %v346 = vpop.f32.mrb[0].mxu0
    %v347 = vadd.f32 %v278, %v346
    %v348 = vpop.f32.mrb[0].mxu0
    %349 = vdwg.mxu0
    %v350 = vmax.f32 %v347, 0.0
    %351 = vst [vmem:[#allocation8] sm:$0xff] %v350
    // Predicated region
    $region42: #{_mlp_forward_impl.1} parent=1 // pred_check
      _
    $region43: #{_mlp_forward_impl.1} parent=1 // pred_check_branch
      %353 = sbr.rel (0) target = $region45
    $region44: #{_mlp_forward_impl.1} parent=1 // pred_region
      %s355 = ssub.s32 128, 128
      %356 = vsyncadd [#allocation4], %s355
      %s358 = sshll.u32 [#allocation8], 4
      %s359 = int_to_ptr.vmem [resolvable:$true] %s358
      %361 = dma.vmem_to_hbm [thread:$0]  %s359, 128, %s7, [#allocation4]
    $region45: #{_mlp_forward_impl.1} parent=1 // pred_fallthru
      _
    // Predicated region
    $region46: #{_mlp_forward_impl.1} parent=1 // pred_check
      _
    $region47: #{_mlp_forward_impl.1} parent=1 // pred_check_branch
      %363 = sbr.rel (0) target = $region49
    $region48: #{_mlp_forward_impl.1} parent=1 // pred_region
      %364 = dma.done [#allocation4], 128
    $region49: #{_mlp_forward_impl.1} parent=1 // pred_fallthru
      _
    %365 = vsyncpa [#allocation3], 1
    %366 = vsyncpa [#allocation6], 1
    %367 = vsyncpa [#allocation4], 1

</llo_original>
